<compile_context>
chip_gen: v7x
topology: tpu7x:2x2x1
jax: 0.10.0
libtpu: 0.0.40
codegen_flags: <defaults>
</compile_context>

<pallas_src>
import functools

import jax
import jax.numpy as jnp
from jax.experimental import pallas as pl
from jax.experimental.pallas import tpu as pltpu

_MIB = 1024 * 1024


# --------------------------------------------------------------------------
# Kernels
# --------------------------------------------------------------------------
def _se_single_kernel(x_ref, w1_ref, w2_ref, o_ref, *, inv_l):
    # x_ref/o_ref: (TB, C, L); w1_ref: (C, C//r); w2_ref: (C//r, C)
    # squeeze: mean over the full L (block L == array L, so no padding), f32 acc
    y = jnp.sum(x_ref[...], axis=-1, dtype=jnp.float32) * inv_l          # (TB, C)
    # excitation: Linear -> ReLU -> Linear -> Sigmoid (M = TB matmuls, f32 acc)
    h = jnp.dot(y.astype(w1_ref.dtype), w1_ref[...],
                preferred_element_type=jnp.float32)                      # (TB, C//r)
    h = jnp.maximum(h, 0.0)
    s = jax.nn.sigmoid(jnp.dot(h.astype(w2_ref.dtype), w2_ref[...],
                               preferred_element_type=jnp.float32))      # (TB, C)
    # scale: re-read the resident VMEM tile (cheap) instead of keeping the
    # whole loaded tile live across the reduction.
    o_ref[...] = x_ref[...] * s[:, :, None].astype(o_ref.dtype)


def _se_gate_kernel(x_ref, w1_ref, w2_ref, s_ref, acc_ref, *, l, inv_l):
    # Phase 1 of the large-tile fallback: accumulate sum over L, emit gate.
    lk = pl.program_id(1)

    @pl.when(lk == 0)
    def _():
        acc_ref[...] = jnp.zeros_like(acc_ref)

    tl = x_ref.shape[-1]
    # Mask the (possibly padded) tail block so the sum only covers the true L.
    lane = jax.lax.broadcasted_iota(jnp.int32, x_ref.shape, dimension=2)
    valid = lane < (l - lk * tl)
    acc_ref[...] += jnp.sum(jnp.where(valid, x_ref[...], 0),
                            axis=-1, dtype=jnp.float32)                  # (1, C)

    @pl.when(lk == pl.num_programs(1) - 1)
    def _():
        y = acc_ref[...] * inv_l                                         # (1, C) f32
        h = jnp.maximum(jnp.dot(y.astype(w1_ref.dtype), w1_ref[...],
                                preferred_element_type=jnp.float32), 0.0)
        s = jax.nn.sigmoid(jnp.dot(h.astype(w2_ref.dtype), w2_ref[...],
                                   preferred_element_type=jnp.float32))  # (1, C)
        s_ref[...] = s[:, :, None]                                       # (1, C, 1)


def _se_scale_kernel(x_ref, s_ref, o_ref):
    # Phase 2 of the large-tile fallback: out = x * gate (pure streaming).
    o_ref[...] = x_ref[...] * s_ref[...].astype(o_ref.dtype)


# --------------------------------------------------------------------------
# Wrapper
# --------------------------------------------------------------------------
def _vmem_budget_bytes():
    phys = None
    try:
        info = pltpu.get_tpu_info()
        for attr in ("vmem_capacity_bytes", "vmem_bytes", "vmem_size_bytes"):
            v = getattr(info, attr, None)
            if v:
                phys = int(v)
                break
    except Exception:
        phys = None
    if phys is None:
        phys = 64 * _MIB                 # conservative: safe on every generation
    if phys >= 96 * _MIB:                # v5e / v6e: 128 MiB physical VMEM
        return 104 * _MIB
    # v7x (64 MiB physical) or unknown: leave headroom for Mosaic internal scratch
    return max(32 * _MIB, phys - 12 * _MIB)


def _se_single_pass(x, w1, w2, budget, w_bytes, slack):
    b, c, l = x.shape
    c_r = w1.shape[1]
    itemsize = jnp.dtype(x.dtype).itemsize
    per_row = c * l * itemsize           # one (1, C, L) slab

    # Batch rows per grid step: ~4 MiB per-step tile, limited by the VMEM
    # budget (2x in + 2x out double buffering) and by keeping >= 2 grid steps
    # when B >= 2 (v7x megacore: both TensorCores stream HBM).
    tb = min(b,
             max(1, (4 * _MIB) // per_row),
             max(1, (budget - 2 * w_bytes - slack) // (4 * per_row)))
    if b >= 2:
        tb = min(tb, (b + 1) // 2)
    tb = max(tb, 1)
    grid_b = pl.cdiv(b, tb)

    kernel = functools.partial(_se_single_kernel, inv_l=1.0 / l)
    cost = pl.CostEstimate(
        flops=4 * b * c * c_r + 2 * b * c * l,
        transcendentals=b * c,
        bytes_accessed=2 * b * c * l * itemsize + 2 * w_bytes,
    )
    return pl.pallas_call(
        kernel,
        out_shape=jax.ShapeDtypeStruct((b, c, l), x.dtype),
        grid=(grid_b,),
        in_specs=[
            pl.BlockSpec((tb, c, l), lambda i: (i, 0, 0)),
            pl.BlockSpec((c, c_r), lambda i: (0, 0)),     # resident weights
            pl.BlockSpec((c_r, c), lambda i: (0, 0)),
        ],
        out_specs=pl.BlockSpec((tb, c, l), lambda i: (i, 0, 0)),
        compiler_params=pltpu.CompilerParams(
            dimension_semantics=("parallel",),
            vmem_limit_bytes=int(budget),
        ),
        cost_estimate=cost,
    )(x, w1, w2)


def _se_two_phase(x, w1, w2, budget, w_bytes, slack):
    b, c, l = x.shape
    c_r = w1.shape[1]
    itemsize = jnp.dtype(x.dtype).itemsize

    # L tile: multiple of 128 (or the full L) sized to the VMEM budget
    # (2x in + 2x out double-buffered blocks in the scale pass).
    avail = max(budget - 2 * w_bytes - slack, 4 * c * 128 * itemsize)
    max_tl = avail // (4 * c * itemsize)
    tl = l if l <= max_tl else max(128, (max_tl // 128) * 128)
    # TODO(synk): if even a (1, C, 128) tile is too large (enormous C), a
    # channel split of the reduction/scale would also be required.
    nl = pl.cdiv(l, tl)

    # Phase 1: gate s = sigmoid(relu(mean(x) @ w1) @ w2), shaped (B, C, 1).
    gate_kernel = functools.partial(_se_gate_kernel, l=l, inv_l=1.0 / l)
    gate = pl.pallas_call(
        gate_kernel,
        out_shape=jax.ShapeDtypeStruct((b, c, 1), jnp.float32),
        grid=(b, nl),
        in_specs=[
            pl.BlockSpec((1, c, tl), lambda i, k: (i, 0, k)),
            pl.BlockSpec((c, c_r), lambda i, k: (0, 0)),
            pl.BlockSpec((c_r, c), lambda i, k: (0, 0)),
        ],
        out_specs=pl.BlockSpec((1, c, 1), lambda i, k: (i, 0, 0)),
        scratch_shapes=[pltpu.VMEM((1, c), jnp.float32)],
        compiler_params=pltpu.CompilerParams(
            dimension_semantics=("parallel", "arbitrary"),
            vmem_limit_bytes=int(budget),
        ),
        cost_estimate=pl.CostEstimate(
            flops=4 * b * c * c_r + 2 * b * c * l,
            transcendentals=b * c,
            bytes_accessed=b * c * l * itemsize + 2 * w_bytes,
        ),
    )(x, w1, w2)

    # Phase 2: out = x * gate (streaming scale).
    return pl.pallas_call(
        _se_scale_kernel,
        out_shape=jax.ShapeDtypeStruct((b, c, l), x.dtype),
        grid=(b, nl),
        in_specs=[
            pl.BlockSpec((1, c, tl), lambda i, k: (i, 0, k)),
            pl.BlockSpec((1, c, 1), lambda i, k: (i, 0, 0)),
        ],
        out_specs=pl.BlockSpec((1, c, tl), lambda i, k: (i, 0, k)),
        compiler_params=pltpu.CompilerParams(
            dimension_semantics=("parallel", "parallel"),
            vmem_limit_bytes=int(budget),
        ),
        cost_estimate=pl.CostEstimate(
            flops=b * c * l,
            transcendentals=0,
            bytes_accessed=2 * b * c * l * itemsize,
        ),
    )(x, gate)


def se_layer(x, w1, w2, *, force_two_phase=False):
    """x: (B, C, L); w1: (C, C//r) = W1.T; w2: (C//r, C) = W2.T."""
    b, c, l = x.shape
    itemsize = jnp.dtype(x.dtype).itemsize
    w_bytes = (w1.size * jnp.dtype(w1.dtype).itemsize
               + w2.size * jnp.dtype(w2.dtype).itemsize)
    budget = _vmem_budget_bytes()
    slack = 2 * _MIB                     # semaphores / small Mosaic scratch

    # Single pass requires one double-buffered (1, C, L) input + output pair.
    per_row = c * l * itemsize
    single_pass_ok = 4 * per_row + 2 * w_bytes + slack <= budget

    if single_pass_ok and not force_two_phase:
        return _se_single_pass(x, w1, w2, budget, w_bytes, slack)
    return _se_two_phase(x, w1, w2, budget, w_bytes, slack)


def se_layer_ref(x, w1, w2):
    # pure-JAX reference for correctness check
    y = jnp.mean(x, axis=-1)
    h = jnp.maximum(y @ w1, 0.0)
    s = jax.nn.sigmoid(h @ w2)
    return x * s[:, :, None]


if __name__ == "__main__":
    B, C, L, R = 5, 8, 48, 2
    key = jax.random.PRNGKey(0)
    kx, k1, k2 = jax.random.split(key, 3)

    x = jax.random.normal(kx, (B, C, L), dtype=jnp.float32)
    # bias-free Linear weights, pre-transposed (w1 = W1.T, w2 = W2.T)
    w1 = jax.random.normal(k1, (C, C // R), dtype=jnp.float32) * 0.1
    w2 = jax.random.normal(k2, (C // R, C), dtype=jnp.float32) * 0.1

    ref = se_layer_ref(x, w1, w2)

    # Fast single-pass path (batch-blocked grid, unpadded L).
    out = jax.block_until_ready(se_layer(x, w1, w2))
    assert out.shape == (B, C, L)
    assert jnp.allclose(out, ref, atol=1e-5, rtol=1e-5)

    # Also exercise the large-tile two-phase fallback path for correctness.
    out2 = jax.block_until_ready(se_layer(x, w1, w2, force_two_phase=True))
    assert out2.shape == (B, C, L)
    assert jnp.allclose(out2, ref, atol=1e-5, rtol=1e-5)

    print("KERNEL_OK")
</pallas_src>

<mosaic_0001>
module attributes {stable_mosaic.version = 11 : i64} {
  func.func @_se_single_kernel(%arg0: i32, %arg1: memref<3x8x48xf32, #tpu.memory_space<vmem>>, %arg2: memref<8x4xf32, #tpu.memory_space<vmem>>, %arg3: memref<4x8xf32, #tpu.memory_space<vmem>>, %arg4: memref<3x8x48xf32, #tpu.memory_space<vmem>>) attributes {dimension_semantics = [#tpu.dimension_semantics<parallel>], iteration_bounds = array<i64: 2>, scalar_prefetch = 0 : i64, scratch_operands = 0 : i64, tpu.core_type = #tpu.core_type<tc>, window_params = [{transform_indices = @transform_0, window_bounds = array<i64: 3, 8, 48>}, {pipeline_mode = #tpu.pipeline_mode<synchronous>, transform_indices = @transform_1, window_bounds = array<i64: 8, 4>}, {pipeline_mode = #tpu.pipeline_mode<synchronous>, transform_indices = @transform_2, window_bounds = array<i64: 4, 8>}, {transform_indices = @transform_3, window_bounds = array<i64: 3, 8, 48>}]} {
    %c0 = arith.constant 0 : index
    %c0_0 = arith.constant 0 : index
    %c0_1 = arith.constant 0 : index
    %0 = vector.load %arg1[%c0, %c0_0, %c0_1] : memref<3x8x48xf32, #tpu.memory_space<vmem>>, vector<3x8x48xf32>
    %cst = arith.constant dense<0.000000e+00> : vector<3x8xf32>
    %1 = vector.multi_reduction <add>, %0, %cst [2] : vector<3x8x48xf32> to vector<3x8xf32>
    %cst_2 = arith.constant 0.020833334 : f32
    %2 = vector.broadcast %cst_2 : f32 to vector<3x8xf32>
    %3 = arith.mulf %1, %2 : vector<3x8xf32>
    %c0_3 = arith.constant 0 : index
    %c0_4 = arith.constant 0 : index
    %4 = vector.load %arg2[%c0_3, %c0_4] : memref<8x4xf32, #tpu.memory_space<vmem>>, vector<8x4xf32>
    %cst_5 = arith.constant dense<0.000000e+00> : vector<3x4xf32>
    %5 = tpu.matmul %3, %4, %cst_5 {dimension_numbers = #tpu.dot_dimension_numbers<[1], [0], [0], [1], [0, 0, 1, 1], [], []>} : vector<3x8xf32>, vector<8x4xf32>, vector<3x4xf32> -> vector<3x4xf32>
    %cst_6 = arith.constant 0.000000e+00 : f32
    %6 = vector.broadcast %cst_6 : f32 to vector<3x4xf32>
    %7 = arith.maximumf %5, %6 : vector<3x4xf32>
    %c0_7 = arith.constant 0 : index
    %c0_8 = arith.constant 0 : index
    %8 = vector.load %arg3[%c0_7, %c0_8] : memref<4x8xf32, #tpu.memory_space<vmem>>, vector<4x8xf32>
    %cst_9 = arith.constant dense<0.000000e+00> : vector<3x8xf32>
    %9 = tpu.matmul %7, %8, %cst_9 {dimension_numbers = #tpu.dot_dimension_numbers<[1], [0], [0], [1], [0, 0, 1, 1], [], []>} : vector<3x4xf32>, vector<4x8xf32>, vector<3x8xf32> -> vector<3x8xf32>
    %10 = arith.negf %9 : vector<3x8xf32>
    %11 = math.exp %10 : vector<3x8xf32>
    %cst_10 = arith.constant 1.000000e+00 : f32
    %12 = vector.broadcast %cst_10 : f32 to vector<3x8xf32>
    %13 = arith.addf %12, %11 : vector<3x8xf32>
    %14 = arith.divf %12, %13 : vector<3x8xf32>
    %c0_11 = arith.constant 0 : index
    %c0_12 = arith.constant 0 : index
    %c0_13 = arith.constant 0 : index
    %15 = vector.load %arg1[%c0_11, %c0_12, %c0_13] : memref<3x8x48xf32, #tpu.memory_space<vmem>>, vector<3x8x48xf32>
    %16 = vector.shape_cast %14 : vector<3x8xf32> to vector<3x8x1xf32>
    %17 = vector.broadcast %16 : vector<3x8x1xf32> to vector<3x8x48xf32>
    %18 = arith.mulf %15, %17 : vector<3x8x48xf32>
    %c0_14 = arith.constant 0 : index
    %c0_15 = arith.constant 0 : index
    %c0_16 = arith.constant 0 : index
    %19 = vector.load %arg4[%c0_14, %c0_15, %c0_16] : memref<3x8x48xf32, #tpu.memory_space<vmem>>, vector<3x8x48xf32>
    tpu.vector_store %arg4[%c0_14, %c0_15, %c0_16], %18 {strides = array<i32>} : memref<3x8x48xf32, #tpu.memory_space<vmem>>, vector<3x8x48xf32>,
    return
  }
  func.func @transform_0(%arg0: i32) -> (i32, i32, i32) {
    %c0_i32 = arith.constant 0 : i32
    %c0_i32_0 = arith.constant 0 : i32
    %c0_i32_1 = arith.constant 0 : i32
    return %arg0, %c0_i32, %c0_i32_0 : i32, i32, i32
  }
  func.func @transform_1(%arg0: i32) -> (i32, i32) {
    %c0_i32 = arith.constant 0 : i32
    %c0_i32_0 = arith.constant 0 : i32
    %c0_i32_1 = arith.constant 0 : i32
    return %c0_i32, %c0_i32_0 : i32, i32
  }
  func.func @transform_2(%arg0: i32) -> (i32, i32) {
    %c0_i32 = arith.constant 0 : i32
    %c0_i32_0 = arith.constant 0 : i32
    %c0_i32_1 = arith.constant 0 : i32
    return %c0_i32, %c0_i32_0 : i32, i32
  }
  func.func @transform_3(%arg0: i32) -> (i32, i32, i32) {
    %c0_i32 = arith.constant 0 : i32
    %c0_i32_0 = arith.constant 0 : i32
    %c0_i32_1 = arith.constant 0 : i32
    return %arg0, %c0_i32, %c0_i32_0 : i32, i32, i32
  }
}

</mosaic_0001>

<llo_original>
// kernel: tpu_custom_call.1
$region0: #{tpu_custom_call.1}
  #allocation0 [shape = 'u32[]', space=smem, size = 0x4, offset = 0x4, fixed_abs, tag = 'smem constant byte address 0x4 - core index']
  #allocation1 [shape = 'u32[144,128]{1,0:T(1,128)}', space=vmem, size = 0x12000, scoped, tag = 'internal scratch']
  %s0 = inlined_call_operand.hbm [shape: f32[5,8,48], index: 0, kind: input, shape index: {}]
  %s1 = inlined_call_operand.vmem [shape: f32[8,4], index: 1, kind: input, shape index: {}]
  %s2 = inlined_call_operand.vmem [shape: f32[4,8], index: 2, kind: input, shape index: {}]
  %s3 = inlined_call_operand.hbm [shape: f32[5,8,48], index: 3, kind: output, shape index: {}]
  %s4 = sld [smem:[#allocation0]]
  $region49: #{tpu_custom_call.1} parent=0
    _
  %s6 = ssub.s32 1, %s4
  %s7 = scalar_select 0, %s6, %s4
  $region1: #{tpu_custom_call.1} parent=0
    #allocation2 [shape = 'u8[24576]{0}', space=vmem, size = 0x6000, scoped, tag = 'input window, operand 0']
    #allocation3 [shape = 's32[2]{0}', space=sflag, size = 0x8, scoped, tag = 'scoped memory for tpu_custom_call.1']
    #allocation4 [shape = 's32[2]{0}', space=sflag, size = 0x8, scoped, tag = 'scoped memory for tpu_custom_call.1']
    #allocation5 [shape = 'u8[24576]{0}', space=vmem, size = 0x6000, scoped, tag = 'output window, operand 0']
    %8 = vsyncpa [#allocation3], 0
    %s9 = scalar_lea.sflag [#allocation3], 1
    %10 = vsyncpa %s9, 0
    %11 = vsyncpa [#allocation4], 0
    %s12 = scalar_lea.sflag [#allocation4], 1
    %13 = vsyncpa %s12, 0
    loop: start=0, step=1, limit=4
    $region2: #{tpu_custom_call.1} parent=1 // loop_pre_header
      _
    $region3: #{tpu_custom_call.1} parent=1 // loop_header
      %s15 = sphi 0, %s19
      %p16 = scmp.ge.s32.totalorder %s15, 4
      %s25 = sphi 0, %s27
      %s28 = sphi 0, %s25
      %s29 = sphi 0, %s28
      %s45 = sphi 0, %s29
      %s49 = sphi 0, %s49
      %s51 = sphi 0, %s49
      %s52 = sphi 0, %s51
      %s66 = sphi 0, %s52
      %s70 = sphi 0, %s70
      %s72 = sphi 0, %s70
      %s73 = sphi 0, %s72
      %s87 = sphi 0, %s73
      %s93 = sphi 0, %s95
      %s96 = sphi 0, %s93
      %s97 = sphi 0, %s96
      %s113 = sphi 0, %s97
    $region4: #{tpu_custom_call.1} parent=1 // loop_header_branch
      %18 = sbr.rel (%p16) target = $region8
    $region5: #{tpu_custom_call.1} parent=1 // loop_body
      %s20 = ssub.s32 %s15, 1
      %s21 = ssub.s32 %s15, 2
      %s22 = sadd.s32 %s15, 1
      %s23 = ssub.s32 %s15, %s22
      %p24 = scmp.eq.s32.totalorder %s23, 0
      %s26 = sadd.s32 %s25, 1
      %s27 = scalar_select %p24, %s25, %s26
      %p30 = pneg %p24
      %p31 = scmp.eq.s32.totalorder %s15, 1
      %p32 = por %p30, %p31
      %p33 = scmp.ne.s32.totalorder %s25, %s28
      %p34 = scmp.eq.s32.totalorder %s15, 0
      %p35 = por %p33, %p34
      %p36 = scmp.ne.s32.totalorder %s25, %s28
      %p37 = scmp.eq.s32.totalorder %s20, 1
      %p38 = por %p36, %p37
      %p39 = scmp.ne.s32.totalorder %s28, %s29
      %p40 = scmp.eq.s32.totalorder %s20, 0
      %p41 = por %p39, %p40
      %p42 = scmp.ne.s32.totalorder %s28, %s29
      %p43 = scmp.eq.s32.totalorder %s21, 1
      %p44 = por %p42, %p43
      %p46 = scmp.ne.s32.totalorder %s29, %s45
      %p47 = scmp.eq.s32.totalorder %s21, 0
      %p48 = por %p46, %p47
      %s50 = sadd.s32 %s49, 1
      %p53 = scmp.eq.s32.totalorder %s15, 1
      %p54 = scmp.ne.s32.totalorder %s49, %s51
      %p55 = scmp.eq.s32.totalorder %s15, 0
      %p56 = por %p54, %p55
      %p57 = scmp.ne.s32.totalorder %s49, %s51
      %p58 = scmp.eq.s32.totalorder %s20, 1
      %p59 = por %p57, %p58
      %p60 = scmp.ne.s32.totalorder %s51, %s52
      %p61 = scmp.eq.s32.totalorder %s20, 0
      %p62 = por %p60, %p61
      %p63 = scmp.ne.s32.totalorder %s51, %s52
      %p64 = scmp.eq.s32.totalorder %s21, 1
      %p65 = por %p63, %p64
      %p67 = scmp.ne.s32.totalorder %s52, %s66
      %p68 = scmp.eq.s32.totalorder %s21, 0
      %p69 = por %p67, %p68
      %s71 = sadd.s32 %s70, 1
      %p74 = scmp.eq.s32.totalorder %s15, 1
      %p75 = scmp.ne.s32.totalorder %s70, %s72
      %p76 = scmp.eq.s32.totalorder %s15, 0
      %p77 = por %p75, %p76
      %p78 = scmp.ne.s32.totalorder %s70, %s72
      %p79 = scmp.eq.s32.totalorder %s20, 1
      %p80 = por %p78, %p79
      %p81 = scmp.ne.s32.totalorder %s72, %s73
      %p82 = scmp.eq.s32.totalorder %s20, 0
      %p83 = por %p81, %p82
      %p84 = scmp.ne.s32.totalorder %s72, %s73
      %p85 = scmp.eq.s32.totalorder %s21, 1
      %p86 = por %p84, %p85
      %p88 = scmp.ne.s32.totalorder %s73, %s87
      %p89 = scmp.eq.s32.totalorder %s21, 0
      %p90 = por %p88, %p89
      %s91 = ssub.s32 %s15, %s22
      %p92 = scmp.eq.s32.totalorder %s91, 0
      %s94 = sadd.s32 %s93, 1
      %s95 = scalar_select %p92, %s93, %s94
      %p98 = pneg %p92
      %p99 = scmp.eq.s32.totalorder %s15, 1
      %p100 = por %p98, %p99
      %p101 = scmp.ne.s32.totalorder %s93, %s96
      %p102 = scmp.eq.s32.totalorder %s15, 0
      %p103 = por %p101, %p102
      %p104 = scmp.ne.s32.totalorder %s93, %s96
      %p105 = scmp.eq.s32.totalorder %s20, 1
      %p106 = por %p104, %p105
      %p107 = scmp.ne.s32.totalorder %s96, %s97
      %p108 = scmp.eq.s32.totalorder %s20, 0
      %p109 = por %p107, %p108
      %p110 = scmp.ne.s32.totalorder %s96, %s97
      %p111 = scmp.eq.s32.totalorder %s21, 1
      %p112 = por %p110, %p111
      %p114 = scmp.ne.s32.totalorder %s97, %s113
      %p115 = scmp.eq.s32.totalorder %s21, 0
      %p116 = por %p114, %p115
      %p117 = scmp.le.s32.totalorder 1, %s15
      %p118 = scmp.lt.s32.totalorder %s15, 3
      %p119 = pnand %p117, %p118
      %p120 = pneg %p119
      // Predicated region
      $region9: #{tpu_custom_call.1} parent=5 // pred_check
        _
      $region10: #{tpu_custom_call.1} parent=5 // pred_check_branch
        %122 = sbr.rel (%p119) target = $region12
      $region11: #{tpu_custom_call.1} parent=5 // pred_region
        %s123 = ssub.s32 %s15, 1
        // Predicated region
        $region13: #{tpu_custom_call.1} parent=11 // pred_check
          %p124 = pneg %p62
        $region14: #{tpu_custom_call.1} parent=11 // pred_check_branch
          %126 = sbr.rel (%p124) target = $region16
        $region15: #{tpu_custom_call.1} parent=11 // pred_region
          _
        $region16: #{tpu_custom_call.1} parent=11 // pred_fallthru
          _
        // Predicated region
        $region17: #{tpu_custom_call.1} parent=11 // pred_check
          %p127 = pneg %p83
        $region18: #{tpu_custom_call.1} parent=11 // pred_check_branch
          %129 = sbr.rel (%p127) target = $region20
        $region19: #{tpu_custom_call.1} parent=11 // pred_region
          _
        $region20: #{tpu_custom_call.1} parent=11 // pred_fallthru
          _
      $region12: #{tpu_custom_call.1} parent=5 // pred_fallthru
        _
      %p130 = scmp.lt.s32.totalorder %s15, 2
      // Predicated region
      $region21: #{tpu_custom_call.1} parent=5 // pred_check
        %p131 = pneg %p130
      $region22: #{tpu_custom_call.1} parent=5 // pred_check_branch
        %133 = sbr.rel (%p131) target = $region24
      $region23: #{tpu_custom_call.1} parent=5 // pred_region
        // Predicated region
        $region25: #{tpu_custom_call.1} parent=23 // pred_check
          %p134 = pneg %p35
        $region26: #{tpu_custom_call.1} parent=23 // pred_check_branch
          %136 = sbr.rel (%p134) target = $region28
        $region27: #{tpu_custom_call.1} parent=23 // pred_region
          %s137 = sand.u32 %s25, 1
          %s138 = scalar_lea.sflag [#allocation3], %s137
          %s139 = sand.u32 %s25, 1
          %s140 = smul.addr %s139, 24
          %s141 = scalar_lea.vmem [#allocation2], %s140
          %s142 = smul.u32 3, %s15
          %s143 = ssub.s32 5, %s142
          %p144 = scmp.lt.s32.totalorder %s143, 3
          %s145 = scalar_select %p144, %s143, 3
          %s146 = smul.u32 128, %s145
          %s148 = ssub.s32 384, %s146
          %149 = vsyncadd %s138, %s148
          %p150 = scmp.ne.s32.totalorder 0, %s146
          %s151 = smul.addr %s142, 128
          %s152 = scalar_lea.hbm %s0, %s151
          %s153 = smul.u32 8, %s145
          %s154 = sshll.u32 %s141, 4
          %s155 = int_to_ptr.vmem [resolvable:$true] %s154
          %s156 = sshll.u32 %s153, 4
          %160 = dma.hbm_to_vmem [thread:$0]  (%p150), %s152, %s156, %s155, %s138, 128, 128, 8
        $region28: #{tpu_custom_call.1} parent=23 // pred_fallthru
          _
      $region24: #{tpu_custom_call.1} parent=5 // pred_fallthru
        _
      %p161 = scmp.le.s32.totalorder 1, %s15
      %p162 = scmp.lt.s32.totalorder %s15, 3
      %p163 = pnand %p161, %p162
      %p164 = pneg %p163
      // Predicated region
      $region29: #{tpu_custom_call.1} parent=5 // pred_check
        _
      $region30: #{tpu_custom_call.1} parent=5 // pred_check_branch
        %166 = sbr.rel (%p163) target = $region32
      $region31: #{tpu_custom_call.1} parent=5 // pred_region
        %s167 = ssub.s32 %s15, 1
        %s168 = sand.u32 %s28, 1
        %s169 = scalar_lea.sflag [#allocation3], %s168
        %s170 = sand.u32 %s28, 1
        %s171 = smul.addr %s170, 24
        %s172 = scalar_lea.vmem [#allocation2], %s171
        // Predicated region
        $region33: #{tpu_custom_call.1} parent=31 // pred_check
          %p173 = pneg %p41
        $region34: #{tpu_custom_call.1} parent=31 // pred_check_branch
          %175 = sbr.rel (%p173) target = $region36
        $region35: #{tpu_custom_call.1} parent=31 // pred_region
          %176 = dma.done %s169, 384
        $region36: #{tpu_custom_call.1} parent=31 // pred_fallthru
          _
        %s177 = sand.u32 %s28, 1
        %s178 = scalar_lea.sflag [#allocation3], %s177
        %s179 = sand.u32 %s28, 1
        %s180 = smul.addr %s179, 24
        %s181 = scalar_lea.vmem [#allocation2], %s180
        %p182 = pneg %p41
        %p183 = pneg %p38
        %p184 = pneg %p62
        %p185 = pneg %p59
        %p186 = pneg %p83
        %p187 = pneg %p80
        %p188 = pneg %p109
        %p189 = pneg %p106
        %s190 = sand.u32 %s96, 1
        %s191 = scalar_lea.sflag [#allocation4], %s190
        %s192 = sand.u32 %s96, 1
        %s193 = smul.addr %s192, 24
        %s194 = scalar_lea.vmem [#allocation5], %s193
        %s195 = smul.u32 3, %s20
        %s196 = ssub.s32 5, %s195
        %p197 = scmp.lt.s32.totalorder %s196, 3
        %s198 = scalar_select %p197, %s196, 3
        %s199 = smul.u32 128, %s198
        %s200 = smul.u32 3, %s20
        %s201 = ssub.s32 5, %s200
        %p202 = scmp.lt.s32.totalorder %s201, 3
        %s203 = scalar_select %p202, %s201, 3
        %s204 = smul.u32 128, %s203
        %v205 = vld [vmem:[%s172] sm:$0xff]
        %v206 = vld [vmem:[%s172 + $0x8] sm:$0xff]
        %v207 = vld [vmem:[%s172 + $0x10] sm:$0xff]
        %vm208 = vcmask 392192
        %v209 = vsel %vm208, %v205, 0.0
        %210 = vadd.xlane.f32.xlu0 %v209
        %v211 = vpop.xlane.xlu0 %210
        %v212 = vsel %vm208, %v206, 0.0
        %213 = vadd.xlane.f32.xlu0 %v212
        %v214 = vpop.xlane.xlu0 %213
        %v215 = vsel %vm208, %v207, 0.0
        %216 = vadd.xlane.f32.xlu0 %v215
        %v217 = vpop.xlane.xlu0 %216
        %v218 = vmul.f32 %v211, 0.020833334
        %v219 = vmul.f32 %v214, 0.020833334
        %v220 = vmul.f32 %v217, 0.020833334
        %v221 = vld [vmem:[%s1] sm:$0xff]
        %v225 = vlaneseq
        %v226 = vand.u32 %v225, 127
        %v227 = vlaneseq
        %v228 = vshrl.u32 %v227, 7
        %v229 = vsub.s32 %v226, %v228
        %v230 = vrot.slane %v218, %v229
        %v231 = vlaneseq
        %v232 = vshrl.u32 %v231, 7
        %v233 = vsub.s32 %v226, %v232
        %v234 = vrot.slane %v219, %v233
        %v235 = vlaneseq
        %v236 = vshrl.u32 %v235, 7
        %v237 = vsub.s32 %v226, %v236
        %v238 = vrot.slane %v220, %v237
        %vm239 = vcmask 1041409
        %v240 = vsel %vm239, %v234, %v230
        %vm241 = vcmask 1042434
        %v242 = vsel %vm241, %v238, %v240
        %vm243 = vcmask 64512
        %v244 = vsel %vm243, %v242, 0
        %246 = vmatprep.subr.mxu0 0.0
        %247 = vmatpush1.msra.mxu0 %v221
        %248 = vmatprep.subr.mxu0 0.0
        %249 = vmatpush1.msra.mxu0 0.0
        %250 = vmatprep.subr.mxu0 0.0
        %251 = vmatpush1.msra.mxu0 0.0
        %252 = vmatprep.subr.mxu0 0.0
        %253 = vmatpush1.msra.mxu0 0.0
        %254 = vmatprep.subr.mxu0 0.0
        %255 = vmatpush1.msra.mxu0 0.0
        %256 = vmatprep.subr.mxu0 0.0
        %257 = vmatpush1.msra.mxu0 0.0
        %258 = vmatprep.subr.mxu0 0.0
        %259 = vmatpush1.msra.mxu0 0.0
        %260 = vmatprep.subr.mxu0 0.0
        %261 = vmatpush1.msra.mxu0 0.0
        %262 = vmatprep.subr.mxu0 0.0
        %263 = vmatpush1.msra.mxu0 0.0
        %264 = vmatprep.subr.mxu0 0.0
        %265 = vmatpush1.msra.mxu0 0.0
        %266 = vmatprep.subr.mxu0 0.0
        %267 = vmatpush1.msra.mxu0 0.0
        %268 = vmatprep.subr.mxu0 0.0
        %269 = vmatpush1.msra.mxu0 0.0
        %270 = vmatprep.subr.mxu0 0.0
        %271 = vmatpush1.msra.mxu0 0.0
        %272 = vmatprep.subr.mxu0 0.0
        %273 = vmatpush1.msra.mxu0 0.0
        %274 = vmatprep.subr.mxu0 0.0
        %275 = vmatpush1.msra.mxu0 0.0
        %276 = vmatprep.subr.mxu0 0.0
        %277 = vmatpush1.msra.mxu0 0.0
        %278 = vmatprep.subr.mxu0 0.0
        %279 = vmatpush1.msra.mxu0 0.0
        %280 = vmatprep.subr.mxu0 0.0
        %281 = vmatpush1.msra.mxu0 0.0
        %282 = vmatprep.subr.mxu0 0.0
        %283 = vmatpush1.msra.mxu0 0.0
        %284 = vmatprep.subr.mxu0 0.0
        %285 = vmatpush1.msra.mxu0 0.0
        %286 = vmatprep.subr.mxu0 0.0
        %287 = vmatpush1.msra.mxu0 0.0
        %288 = vmatprep.subr.mxu0 0.0
        %289 = vmatpush1.msra.mxu0 0.0
        %290 = vmatprep.subr.mxu0 0.0
        %291 = vmatpush1.msra.mxu0 0.0
        %292 = vmatprep.subr.mxu0 0.0
        %293 = vmatpush1.msra.mxu0 0.0
        %294 = vmatprep.subr.mxu0 0.0
        %295 = vmatpush1.msra.mxu0 0.0
        %296 = vmatprep.subr.mxu0 0.0
        %297 = vmatpush1.msra.mxu0 0.0
        %298 = vmatprep.subr.mxu0 0.0
        %299 = vmatpush1.msra.mxu0 0.0
        %300 = vmatprep.subr.mxu0 0.0
        %301 = vmatpush1.msra.mxu0 0.0
        %302 = vmatprep.subr.mxu0 0.0
        %303 = vmatpush1.msra.mxu0 0.0
        %304 = vmatprep.subr.mxu0 0.0
        %305 = vmatpush1.msra.mxu0 0.0
        %306 = vmatprep.subr.mxu0 0.0
        %307 = vmatpush1.msra.mxu0 0.0
        %308 = vmatprep.subr.mxu0 0.0
        %309 = vmatpush1.msra.mxu0 0.0
        %310 = vmatprep.mubr.f32.mxu0 0.0
        %311 = vmatmul.mubr.f32.gmra.mrb[0].mxu0 %v244
        %v312 = vpop.f32.mrb[0].mxu0
        %v313 = vadd.f32 0.0, %v312
        %v314 = vpop.f32.mrb[0].mxu0
        %315 = vdwg.mxu0
        %v316 = vmax.f32 %v313, 0.0
        %v317 = vld [vmem:[%s2] sm:$0xf]
        %vm318 = vcmask 31744
        %v320 = vsel %vm318, %v316, 0
        %vm322 = vcmask 1043456
        %v324 = vsel %vm322, %v317, 0
        %326 = vmatprep.subr.mxu0 0.0
        %327 = vmatpush1.msra.mxu0 %v324
        %328 = vmatprep.subr.mxu0 0.0
        %329 = vmatpush1.msra.mxu0 0.0
        %330 = vmatprep.subr.mxu0 0.0
        %331 = vmatpush1.msra.mxu0 0.0
        %332 = vmatprep.subr.mxu0 0.0
        %333 = vmatpush1.msra.mxu0 0.0
        %334 = vmatprep.subr.mxu0 0.0
        %335 = vmatpush1.msra.mxu0 0.0
        %336 = vmatprep.subr.mxu0 0.0
        %337 = vmatpush1.msra.mxu0 0.0
        %338 = vmatprep.subr.mxu0 0.0
        %339 = vmatpush1.msra.mxu0 0.0
        %340 = vmatprep.subr.mxu0 0.0
        %341 = vmatpush1.msra.mxu0 0.0
        %342 = vmatprep.subr.mxu0 0.0
        %343 = vmatpush1.msra.mxu0 0.0
        %344 = vmatprep.subr.mxu0 0.0
        %345 = vmatpush1.msra.mxu0 0.0
        %346 = vmatprep.subr.mxu0 0.0
        %347 = vmatpush1.msra.mxu0 0.0
        %348 = vmatprep.subr.mxu0 0.0
        %349 = vmatpush1.msra.mxu0 0.0
        %350 = vmatprep.subr.mxu0 0.0
        %351 = vmatpush1.msra.mxu0 0.0
        %352 = vmatprep.subr.mxu0 0.0
        %353 = vmatpush1.msra.mxu0 0.0
        %354 = vmatprep.subr.mxu0 0.0
        %355 = vmatpush1.msra.mxu0 0.0
        %356 = vmatprep.subr.mxu0 0.0
        %357 = vmatpush1.msra.mxu0 0.0
        %358 = vmatprep.subr.mxu0 0.0
        %359 = vmatpush1.msra.mxu0 0.0
        %360 = vmatprep.subr.mxu0 0.0
        %361 = vmatpush1.msra.mxu0 0.0
        %362 = vmatprep.subr.mxu0 0.0
        %363 = vmatpush1.msra.mxu0 0.0
        %364 = vmatprep.subr.mxu0 0.0
        %365 = vmatpush1.msra.mxu0 0.0
        %366 = vmatprep.subr.mxu0 0.0
        %367 = vmatpush1.msra.mxu0 0.0
        %368 = vmatprep.subr.mxu0 0.0
        %369 = vmatpush1.msra.mxu0 0.0
        %370 = vmatprep.subr.mxu0 0.0
        %371 = vmatpush1.msra.mxu0 0.0
        %372 = vmatprep.subr.mxu0 0.0
        %373 = vmatpush1.msra.mxu0 0.0
        %374 = vmatprep.subr.mxu0 0.0
        %375 = vmatpush1.msra.mxu0 0.0
        %376 = vmatprep.subr.mxu0 0.0
        %377 = vmatpush1.msra.mxu0 0.0
        %378 = vmatprep.subr.mxu0 0.0
        %379 = vmatpush1.msra.mxu0 0.0
        %380 = vmatprep.subr.mxu0 0.0
        %381 = vmatpush1.msra.mxu0 0.0
        %382 = vmatprep.subr.mxu0 0.0
        %383 = vmatpush1.msra.mxu0 0.0
        %384 = vmatprep.subr.mxu0 0.0
        %385 = vmatpush1.msra.mxu0 0.0
        %386 = vmatprep.subr.mxu0 0.0
        %387 = vmatpush1.msra.mxu0 0.0
        %388 = vmatprep.subr.mxu0 0.0
        %389 = vmatpush1.msra.mxu0 0.0
        %390 = vmatprep.mubr.f32.mxu0 0.0
        %391 = vmatmul.mubr.f32.gmra.mrb[0].mxu0 %v320
        %v392 = vpop.f32.mrb[0].mxu0
        %v393 = vadd.f32 0.0, %v392
        %v394 = vpop.f32.mrb[0].mxu0
        %395 = vdwg.mxu0
        %v396 = vxor.u32 %v393, 2147483648
        %v397 = vmul.f32 %v396, 1.442695
        %v398 = vpow.pop %v397
        %v399 = vadd.f32 %v398, 1.0
        %v400 = vrcp.pop %v399
        %v401 = vmul.f32 1.0, %v400
        %v402 = vlaneseq
        %v403 = vshrl.u32 %v402, 7
        %v404 = vsub.s32 0, %v403
        %v405 = vrot.slane %v401, %v404
        %407 = vbcast.lane.b32.xlu0 %v405, 256
        %v408 = vpop.permute.xlu0 %407
        %v409 = vlaneseq
        %v410 = vshrl.u32 %v409, 7
        %v411 = vsub.s32 1, %v410
        %v412 = vrot.slane %v401, %v411
        %414 = vbcast.lane.b32.xlu0 %v412, 256
        %v415 = vpop.permute.xlu0 %414
        %v416 = vlaneseq
        %v417 = vshrl.u32 %v416, 7
        %v418 = vsub.s32 2, %v417
        %v419 = vrot.slane %v401, %v418
        %421 = vbcast.lane.b32.xlu0 %v419, 256
        %v422 = vpop.permute.xlu0 %421
        %v423 = vmul.f32 %v205, %v408
        %v424 = vmul.f32 %v206, %v415
        %v425 = vmul.f32 %v207, %v422
        %426 = vst.msk [vmem:[%s194] sm:$0xff] %vm208, %v423
        %427 = vst.msk [vmem:[%s194 + $0x8] sm:$0xff] %vm208, %v424
        %428 = vst.msk [vmem:[%s194 + $0x10] sm:$0xff] %vm208, %v425
        %s429 = sand.u32 %s96, 1
        %s430 = scalar_lea.sflag [#allocation4], %s429
        %s431 = sand.u32 %s96, 1
        %s432 = smul.addr %s431, 24
        %s433 = scalar_lea.vmem [#allocation5], %s432
        // Predicated region
        $region37: #{tpu_custom_call.1} parent=31 // pred_check
          %p434 = pneg %p106
        $region38: #{tpu_custom_call.1} parent=31 // pred_check_branch
          %436 = sbr.rel (%p434) target = $region40
        $region39: #{tpu_custom_call.1} parent=31 // pred_region
          %s437 = smul.u32 3, %s20
          %s438 = ssub.s32 5, %s437
          %p439 = scmp.lt.s32.totalorder %s438, 3
          %s440 = scalar_select %p439, %s438, 3
          %s441 = smul.u32 128, %s440
          %s443 = ssub.s32 384, %s441
          %444 = vsyncadd %s430, %s443
          %p445 = scmp.ne.s32.totalorder 0, %s441
          %s446 = smul.addr %s437, 128
          %s447 = scalar_lea.hbm %s3, %s446
          %s448 = smul.u32 8, %s440
          %s449 = sshll.u32 %s433, 4
          %s450 = int_to_ptr.vmem [resolvable:$true] %s449
          %s451 = sshll.u32 %s448, 4
          %455 = dma.vmem_to_hbm [thread:$0]  (%p445), %s450, %s451, %s447, %s430, 128, 128, 8
        $region40: #{tpu_custom_call.1} parent=31 // pred_fallthru
          _
      $region32: #{tpu_custom_call.1} parent=5 // pred_fallthru
        _
      %p456 = scmp.le.s32.totalorder 2, %s15
      // Predicated region
      $region41: #{tpu_custom_call.1} parent=5 // pred_check
        %p457 = pneg %p456
      $region42: #{tpu_custom_call.1} parent=5 // pred_check_branch
        %459 = sbr.rel (%p457) target = $region44
      $region43: #{tpu_custom_call.1} parent=5 // pred_region
        %s460 = ssub.s32 %s15, 2
        // Predicated region
        $region45: #{tpu_custom_call.1} parent=43 // pred_check
          %p461 = pneg %p112
        $region46: #{tpu_custom_call.1} parent=43 // pred_check_branch
          %463 = sbr.rel (%p461) target = $region48
        $region47: #{tpu_custom_call.1} parent=43 // pred_region
          %s464 = sand.u32 %s97, 1
          %s465 = scalar_lea.sflag [#allocation4], %s464
          %s466 = sand.u32 %s97, 1
          %s467 = smul.addr %s466, 24
          %s468 = scalar_lea.vmem [#allocation5], %s467
          %469 = dma.done %s465, 384
        $region48: #{tpu_custom_call.1} parent=43 // pred_fallthru
          _
      $region44: #{tpu_custom_call.1} parent=5 // pred_fallthru
        _
    $region6: #{tpu_custom_call.1} parent=1 // loop_footer
      %s19 = sadd.s32 1, %s15
    $region7: #{tpu_custom_call.1} parent=1 // loop_footer_branch
      %14 = sbr.rel target = $region3
    $region8: #{tpu_custom_call.1} parent=1 // loop_exit
      _
    %470 = vsyncpa [#allocation3], 1
    %s471 = scalar_lea.sflag [#allocation3], 1
    %472 = vsyncpa %s471, 1
    %473 = vsyncpa [#allocation4], 1
    %s474 = scalar_lea.sflag [#allocation4], 1
    %475 = vsyncpa %s474, 1

</llo_original>
